<compile_context>
chip_gen: v7x
topology: tpu7x:2x2x1
jax: 0.10.0
libtpu: 0.0.40
codegen_flags: <defaults>
</compile_context>

<pallas_src>
import functools
import math

import jax
import jax.numpy as jnp
from jax.experimental import pallas as pl
from jax.experimental.pallas import tpu as pltpu


def _round_up(x, m):
    return ((x + m - 1) // m) * m


def _attn_kernel(nk_ref, q_ref, k_ref, v_ref, vl_ref, o_ref,
                 m_sc, l_sc, acc_sc, *, k_real, mask_k_pad):
    # nk_ref : (num_batch_blocks,) int32 SMEM scalar prefetch: #K-tiles to run
    # q_ref  : (bt, tq, D)  bf16 (already scaled by 1/sqrt(D))
    # k_ref  : (bt, tk, D)  bf16      v_ref : (bt, tk, Dv) bf16
    # vl_ref : (bt, tq, 1)  int32 per-row valid length (resident across ki)
    # o_ref  : (bt, tq, Dv)
    # m_sc / l_sc : (bt, tq, 1) f32 scratch ; acc_sc : (bt, tq, Dv) f32 scratch
    b = pl.program_id(0)
    ki = pl.program_id(2)
    tk = k_ref.shape[1]

    @pl.when(ki == 0)
    def _init():
        m_sc[...] = jnp.full_like(m_sc, -jnp.inf)
        l_sc[...] = jnp.zeros_like(l_sc)
        acc_sc[...] = jnp.zeros_like(acc_sc)

    # Skip K tiles that are fully masked for every row of this batch block.
    @pl.when(ki < nk_ref[b])
    def _body():
        # QK^T on the MXU in bf16 with f32 accumulation; contracting the last
        # dims of both operands avoids any in-kernel transpose / XLU relayout.
        s = jnp.einsum("bqd,bkd->bqk", q_ref[...], k_ref[...],
                       preferred_element_type=jnp.float32)

        # sequence_mask (d2l semantics): key positions >= valid_len get -1e6.
        # Tile-local iota; the per-step offset is folded into the tiny
        # (bt, tq, 1) valid-length operand instead of the (bt, tq, tk) iota.
        off = ki * tk
        col = jax.lax.broadcasted_iota(jnp.int32, s.shape, 2)
        vl_local = vl_ref[...] - off
        if mask_k_pad:
            # Padded key rows (global col >= K) must vanish from the softmax
            # denominator entirely (-1e30 << -1e6) so that rows with
            # valid_len == 0 still normalize over K, matching the reference.
            s = jnp.where(col < vl_local, s,
                          jnp.where(col < (k_real - off),
                                    jnp.float32(-1.0e6), jnp.float32(-1.0e30)))
        else:
            s = jnp.where(col < vl_local, s, jnp.float32(-1.0e6))

        # Online (flash) softmax update.
        m_prev = m_sc[...]
        m_new = jnp.maximum(m_prev, jnp.max(s, axis=-1, keepdims=True))
        alpha = jnp.exp(m_prev - m_new)
        p = jnp.exp(s - m_new)                                 # (bt, tq, tk)
        l_sc[...] = alpha * l_sc[...] + jnp.sum(p, axis=-1, keepdims=True)
        acc_sc[...] = alpha * acc_sc[...] + jnp.einsum(
            "bqk,bkv->bqv", p.astype(v_ref.dtype), v_ref[...],
            preferred_element_type=jnp.float32)
        m_sc[...] = m_new

    # Dropout: identity (eval mode).
    # TODO(synk): training-mode dropout via pltpu.prng_* not implemented.

    @pl.when(ki == pl.num_programs(2) - 1)
    def _finalize():
        # Deferred normalization: one (tq, 1) reciprocal + (tq, Dv) multiply.
        inv_l = pl.reciprocal(l_sc[...], approx=False)
        o_ref[...] = (acc_sc[...] * inv_l).astype(o_ref.dtype)


def dot_product_attention(query, key, value, valid_len=None, *, tq=512, tk=512,
                          block_b=None, compute_dtype=jnp.bfloat16):
    """query: (B, Q, D), key: (B, K, D), value: (B, K, Dv),
    valid_len: None | (B,) | (B, Q)."""
    query = jnp.asarray(query)
    key = jnp.asarray(key)
    value = jnp.asarray(value)
    B, Q, D = query.shape
    _, K, _ = key.shape
    Dv = value.shape[-1]
    out_dtype = query.dtype

    # Normalize valid_len to per-(batch, query) int32 (B, Q), matching
    # masked_softmax's repeat_interleave / reshape(-1) semantics.
    if valid_len is None:
        vl = jnp.full((B, Q), K, dtype=jnp.int32)
    else:
        valid_len = jnp.asarray(valid_len, dtype=jnp.int32)
        if valid_len.ndim == 1:
            vl = jnp.broadcast_to(valid_len[:, None], (B, Q))
        else:
            vl = valid_len.reshape(B, Q)
        vl = jnp.minimum(vl, K)  # padded key rows must never become valid

    # --- Tiling: feature dims pass through (block last dim == full array dim);
    # only the sequence dims are padded, and only when needed. ---
    tq = min(tq, _round_up(Q, 8))
    tk = min(tk, _round_up(K, 8))
    Qp = _round_up(Q, tq)
    Kp = _round_up(K, tk)

    # Batch blocking for tiny Q/K problems (amortizes per-grid-step overhead),
    # budgeted with the double-buffer factor and the (tq, tk) s/p temporaries.
    in_bytes = jnp.dtype(compute_dtype).itemsize
    if block_b is None:
        per_batch_bytes = (
            2 * in_bytes * (tq * D + tk * D + tk * Dv)   # double-buffered q/k/v
            + 4 * 2 * tq * Dv                            # acc scratch + out blk
            + 4 * 2 * tq * tk)                           # s / p temporaries
        block_b = max(1, min(B, (8 << 20) // max(per_batch_bytes, 1)))
    while B % block_b:
        block_b -= 1
    # Megacore guard: never collapse both parallel grid axes to extent 1 when
    # batch splitting is possible (keeps v7x's second TensorCore busy).
    if (Qp // tq) < 2:
        while block_b > 1 and (B // block_b) < 2:
            block_b -= 1
            while B % block_b:
                block_b -= 1
    bt = block_b
    nb = B // bt

    # Pre-scale Q once (hoisted out of the K loop) and stream Q/K/V in bf16.
    scale = 1.0 / math.sqrt(D)
    q_in = (query * scale).astype(compute_dtype)
    k_in = key.astype(compute_dtype)
    v_in = value.astype(compute_dtype)
    if Qp != Q:
        q_in = jnp.pad(q_in, ((0, 0), (0, Qp - Q), (0, 0)))
    if Kp != K:
        k_in = jnp.pad(k_in, ((0, 0), (0, Kp - K), (0, 0)))
        v_in = jnp.pad(v_in, ((0, 0), (0, Kp - K), (0, 0)))
    vlp = jnp.full((B, Qp, 1), K, jnp.int32).at[:, :Q, 0].set(vl)

    # Scalar prefetch: #K-tiles each batch block actually needs.  A block that
    # contains a valid_len == 0 row must process every real-K tile so its
    # softmax normalizes over all K keys (d2l -1e6 semantics).
    vl_eff = jnp.where(jnp.min(vl, axis=1) == 0, K, jnp.max(vl, axis=1))
    blk_max = jnp.max(vl_eff.reshape(nb, bt), axis=1)
    nk = ((blk_max + tk - 1) // tk).astype(jnp.int32)        # >= 1 everywhere

    kernel = functools.partial(_attn_kernel, k_real=K, mask_k_pad=(Kp != K))
    grid = (nb, Qp // tq, Kp // tk)

    out = pl.pallas_call(
        kernel,
        out_shape=jax.ShapeDtypeStruct((B, Qp, Dv), out_dtype),
        grid_spec=pltpu.PrefetchScalarGridSpec(
            num_scalar_prefetch=1,
            grid=grid,
            in_specs=[
                pl.BlockSpec((bt, tq, D), lambda b, qi, ki, nk: (b, qi, 0)),
                # Clamp skipped K steps to the last useful tile: no fresh DMA
                # is issued for fully-masked tiles.
                pl.BlockSpec((bt, tk, D),
                             lambda b, qi, ki, nk: (b, jnp.minimum(ki, nk[b] - 1), 0)),
                pl.BlockSpec((bt, tk, Dv),
                             lambda b, qi, ki, nk: (b, jnp.minimum(ki, nk[b] - 1), 0)),
                pl.BlockSpec((bt, tq, 1), lambda b, qi, ki, nk: (b, qi, 0)),
            ],
            out_specs=pl.BlockSpec((bt, tq, Dv), lambda b, qi, ki, nk: (b, qi, 0)),
            scratch_shapes=[
                pltpu.VMEM((bt, tq, 1), jnp.float32),    # m: running row max
                pltpu.VMEM((bt, tq, 1), jnp.float32),    # l: running denominator
                pltpu.VMEM((bt, tq, Dv), jnp.float32),   # acc: unnormalized P@V
            ],
        ),
        compiler_params=pltpu.CompilerParams(
            dimension_semantics=("parallel", "parallel", "arbitrary"),
            vmem_limit_bytes=48 * 1024 * 1024,
        ),
    )(nk, q_in, k_in, v_in, vlp)

    if Qp != Q:
        out = out[:, :Q, :]
    return out


def _reference(query, key, value, valid_len=None):
    d = query.shape[-1]
    scores = jnp.einsum("bqd,bkd->bqk", query, key) / math.sqrt(d)
    if valid_len is not None:
        vl = jnp.asarray(valid_len, dtype=jnp.int32)
        if vl.ndim == 1:
            vl = jnp.broadcast_to(vl[:, None], scores.shape[:2])
        col = jnp.arange(scores.shape[-1])[None, None, :]
        scores = jnp.where(col < vl[:, :, None], scores, -1.0e6)
    w = jax.nn.softmax(scores, axis=-1)
    return jnp.einsum("bqk,bkv->bqv", w, value)


if __name__ == "__main__":
    key0 = jax.random.PRNGKey(0)
    kq, kk, kv = jax.random.split(key0, 3)

    # Small shapes (matches the module's toy usage).
    B, Q, K, D, Dv = 2, 8, 8, 32, 32
    query = jax.random.normal(kq, (B, Q, D), dtype=jnp.float32)
    key_ = jax.random.normal(kk, (B, K, D), dtype=jnp.float32)
    value = jax.random.normal(kv, (B, K, Dv), dtype=jnp.float32)

    # bf16 MXU path -> tolerances loosened vs the old f32 kernel.
    TOL = dict(atol=5e-2, rtol=5e-2)

    # 1) per-batch valid lengths
    valid_len = jnp.array([3, 6], dtype=jnp.int32)
    out = jax.block_until_ready(dot_product_attention(query, key_, value, valid_len))
    ref = _reference(query, key_, value, valid_len)
    assert out.shape == (B, Q, Dv)
    assert jnp.allclose(out, ref, **TOL), "mismatch vs reference (1-D mask)"

    # 2) no mask
    out2 = jax.block_until_ready(dot_product_attention(query, key_, value, None))
    ref2 = _reference(query, key_, value, None)
    assert jnp.allclose(out2, ref2, **TOL), "mismatch (no mask)"

    # 3) per-(batch, query) valid lengths (2-D)
    vl2 = jnp.array([[1, 2, 3, 4, 5, 6, 7, 8], [8, 7, 6, 5, 4, 3, 2, 1]], dtype=jnp.int32)
    out3 = jax.block_until_ready(dot_product_attention(query, key_, value, vl2))
    ref3 = _reference(query, key_, value, vl2)
    assert jnp.allclose(out3, ref3, **TOL), "mismatch (2-D mask)"

    # 4) larger shape: multiple K tiles, ragged lengths (exercises the flash
    #    tiling, the scalar-prefetched tile skipping, and the padded-K mask).
    B2, Q2, K2, D2, Dv2 = 2, 384, 1280, 64, 96
    kq2, kk2, kv2 = jax.random.split(jax.random.PRNGKey(1), 3)
    q_big = jax.random.normal(kq2, (B2, Q2, D2), dtype=jnp.float32)
    k_big = jax.random.normal(kk2, (B2, K2, D2), dtype=jnp.float32)
    v_big = jax.random.normal(kv2, (B2, K2, Dv2), dtype=jnp.float32)
    vl_big = jnp.array([1000, 37], dtype=jnp.int32)
    out4 = jax.block_until_ready(dot_product_attention(q_big, k_big, v_big, vl_big))
    ref4 = _reference(q_big, k_big, v_big, vl_big)
    assert out4.shape == (B2, Q2, Dv2)
    assert jnp.allclose(out4, ref4, **TOL), "mismatch (tiled path)"

    # 5) valid_len == 0 with padded K: softmax must normalize over K (not Kp).
    vl_zero = jnp.array([0, 700], dtype=jnp.int32)
    out5 = jax.block_until_ready(dot_product_attention(q_big, k_big, v_big, vl_zero))
    ref5 = _reference(q_big, k_big, v_big, vl_zero)
    assert jnp.allclose(out5, ref5, **TOL), "mismatch (valid_len == 0 row)"

    print("KERNEL_OK")
</pallas_src>

<mosaic_0001>
module attributes {stable_mosaic.version = 11 : i64} {
  func.func @_attn_kernel(%arg0: i32, %arg1: i32, %arg2: i32, %arg3: memref<2xi32, #tpu.memory_space<smem>>, %arg4: memref<1x8x32xbf16, #tpu.memory_space<vmem>>, %arg5: memref<1x8x32xbf16, #tpu.memory_space<vmem>>, %arg6: memref<1x8x32xbf16, #tpu.memory_space<vmem>>, %arg7: memref<1x8x1xi32, #tpu.memory_space<vmem>>, %arg8: memref<1x8x32xf32, #tpu.memory_space<vmem>>, %arg9: memref<1x8x1xf32, #tpu.memory_space<vmem>>, %arg10: memref<1x8x1xf32, #tpu.memory_space<vmem>>, %arg11: memref<1x8x32xf32, #tpu.memory_space<vmem>>) attributes {dimension_semantics = [#tpu.dimension_semantics<parallel>, #tpu.dimension_semantics<parallel>, #tpu.dimension_semantics<arbitrary>], iteration_bounds = array<i64: 2, 1, 1>, scalar_prefetch = 1 : i64, scratch_operands = 3 : i64, tpu.core_type = #tpu.core_type<tc>, window_params = [{transform_indices = @transform_0, window_bounds = array<i64: 1, 8, 32>}, {transform_indices = @transform_1, window_bounds = array<i64: 1, 8, 32>}, {transform_indices = @transform_2, window_bounds = array<i64: 1, 8, 32>}, {transform_indices = @transform_3, window_bounds = array<i64: 1, 8, 1>}, {transform_indices = @transform_4, window_bounds = array<i64: 1, 8, 32>}]} {
    %c0_i32 = arith.constant 0 : i32
    %0 = arith.cmpi eq, %arg2, %c0_i32 : i32
    %1 = arith.extui %0 : i1 to i32
    %c0_i32_0 = arith.constant 0 : i32
    %2 = arith.cmpi ne, %1, %c0_i32_0 : i32
    scf.if %2 {
      %cst = arith.constant 0xFF800000 : f32
      %11 = vector.broadcast %cst : f32 to vector<1x8x1xf32>
      %c0 = arith.constant 0 : index
      %c0_4 = arith.constant 0 : index
      %c0_5 = arith.constant 0 : index
      %12 = vector.load %arg9[%c0, %c0_4, %c0_5] : memref<1x8x1xf32, #tpu.memory_space<vmem>>, vector<1x8x1xf32>
      tpu.vector_store %arg9[%c0, %c0_4, %c0_5], %11 {strides = array<i32>} : memref<1x8x1xf32, #tpu.memory_space<vmem>>, vector<1x8x1xf32>,
      %cst_6 = arith.constant 0.000000e+00 : f32
      %13 = vector.broadcast %cst_6 : f32 to vector<1x8x1xf32>
      %c0_7 = arith.constant 0 : index
      %c0_8 = arith.constant 0 : index
      %c0_9 = arith.constant 0 : index
      %14 = vector.load %arg10[%c0_7, %c0_8, %c0_9] : memref<1x8x1xf32, #tpu.memory_space<vmem>>, vector<1x8x1xf32>
      tpu.vector_store %arg10[%c0_7, %c0_8, %c0_9], %13 {strides = array<i32>} : memref<1x8x1xf32, #tpu.memory_space<vmem>>, vector<1x8x1xf32>,
      %cst_10 = arith.constant 0.000000e+00 : f32
      %15 = vector.broadcast %cst_10 : f32 to vector<1x8x32xf32>
      %c0_11 = arith.constant 0 : index
      %c0_12 = arith.constant 0 : index
      %c0_13 = arith.constant 0 : index
      %16 = vector.load %arg11[%c0_11, %c0_12, %c0_13] : memref<1x8x32xf32, #tpu.memory_space<vmem>>, vector<1x8x32xf32>
      tpu.vector_store %arg11[%c0_11, %c0_12, %c0_13], %15 {strides = array<i32>} : memref<1x8x32xf32, #tpu.memory_space<vmem>>, vector<1x8x32xf32>,
    } else {
    }
    %3 = arith.index_cast %arg0 : i32 to index
    %4 = memref.load %arg3[%3] : memref<2xi32, #tpu.memory_space<smem>>
    %5 = arith.cmpi slt, %arg2, %4 : i32
    %6 = arith.extui %5 : i1 to i32
    %c0_i32_1 = arith.constant 0 : i32
    %7 = arith.cmpi ne, %6, %c0_i32_1 : i32
    scf.if %7 {
      %c0 = arith.constant 0 : index
      %c0_4 = arith.constant 0 : index
      %c0_5 = arith.constant 0 : index
      %11 = vector.load %arg4[%c0, %c0_4, %c0_5] : memref<1x8x32xbf16, #tpu.memory_space<vmem>>, vector<1x8x32xbf16>
      %c0_6 = arith.constant 0 : index
      %c0_7 = arith.constant 0 : index
      %c0_8 = arith.constant 0 : index
      %12 = vector.load %arg5[%c0_6, %c0_7, %c0_8] : memref<1x8x32xbf16, #tpu.memory_space<vmem>>, vector<1x8x32xbf16>
      "tpu.trace_start"() <{level = 10 : i32, message = "bqd,bkd->bqk"}> : () -> ()
      %cst = arith.constant dense<0.000000e+00> : vector<1x8x8xf32>
      %13 = tpu.matmul %11, %12, %cst {dimension_numbers = #tpu.dot_dimension_numbers<[2], [2], [1], [1], [0, 0, 0, 1, 1, 1], [0], [0]>} : vector<1x8x32xbf16>, vector<1x8x32xbf16>, vector<1x8x8xf32> -> vector<1x8x8xf32>
      "tpu.trace_stop"() : () -> ()
      %c8_i32 = arith.constant 8 : i32
      %14 = arith.muli %arg2, %c8_i32 : i32
      %15 = tpu.iota {dimensions = array<i32: 2>} : vector<1x8x8xi32>
      %c0_9 = arith.constant 0 : index
      %c0_10 = arith.constant 0 : index
      %c0_11 = arith.constant 0 : index
      %16 = vector.load %arg7[%c0_9, %c0_10, %c0_11] : memref<1x8x1xi32, #tpu.memory_space<vmem>>, vector<1x8x1xi32>
      %17 = vector.broadcast %14 : i32 to vector<1x8x1xi32>
      %18 = arith.subi %16, %17 : vector<1x8x1xi32>
      %19 = vector.broadcast %18 : vector<1x8x1xi32> to vector<1x8x8xi32>
      %20 = arith.cmpi slt, %15, %19 : vector<1x8x8xi32>
      %cst_12 = arith.constant -1.000000e+06 : f32
      %21 = vector.broadcast %cst_12 : f32 to vector<1x8x8xf32>
      %22 = arith.select %20, %13, %21 : vector<1x8x8xi1>, vector<1x8x8xf32>
      %c0_13 = arith.constant 0 : index
      %c0_14 = arith.constant 0 : index
      %c0_15 = arith.constant 0 : index
      %23 = vector.load %arg9[%c0_13, %c0_14, %c0_15] : memref<1x8x1xf32, #tpu.memory_space<vmem>>, vector<1x8x1xf32>
      %cst_16 = arith.constant dense<0xFF800000> : vector<1x8xf32>
      %24 = vector.multi_reduction <maximumf>, %22, %cst_16 [2] : vector<1x8x8xf32> to vector<1x8xf32>
      %25 = vector.shape_cast %24 : vector<1x8xf32> to vector<1x8x1xf32>
      %26 = arith.maximumf %23, %25 : vector<1x8x1xf32>
      %27 = arith.subf %23, %26 : vector<1x8x1xf32>
      %28 = math.exp %27 : vector<1x8x1xf32>
      %29 = vector.broadcast %26 : vector<1x8x1xf32> to vector<1x8x8xf32>
      %30 = arith.subf %22, %29 : vector<1x8x8xf32>
      %31 = math.exp %30 : vector<1x8x8xf32>
      %c0_17 = arith.constant 0 : index
      %c0_18 = arith.constant 0 : index
      %c0_19 = arith.constant 0 : index
      %32 = vector.load %arg10[%c0_17, %c0_18, %c0_19] : memref<1x8x1xf32, #tpu.memory_space<vmem>>, vector<1x8x1xf32>
      %33 = arith.mulf %28, %32 : vector<1x8x1xf32>
      %cst_20 = arith.constant dense<0.000000e+00> : vector<1x8xf32>
      %34 = vector.multi_reduction <add>, %31, %cst_20 [2] : vector<1x8x8xf32> to vector<1x8xf32>
      %35 = vector.shape_cast %34 : vector<1x8xf32> to vector<1x8x1xf32>
      %36 = arith.addf %33, %35 : vector<1x8x1xf32>
      %c0_21 = arith.constant 0 : index
      %c0_22 = arith.constant 0 : index
      %c0_23 = arith.constant 0 : index
      %37 = vector.load %arg10[%c0_21, %c0_22, %c0_23] : memref<1x8x1xf32, #tpu.memory_space<vmem>>, vector<1x8x1xf32>
      tpu.vector_store %arg10[%c0_21, %c0_22, %c0_23], %36 {strides = array<i32>} : memref<1x8x1xf32, #tpu.memory_space<vmem>>, vector<1x8x1xf32>,
      %c0_24 = arith.constant 0 : index
      %c0_25 = arith.constant 0 : index
      %c0_26 = arith.constant 0 : index
      %38 = vector.load %arg11[%c0_24, %c0_25, %c0_26] : memref<1x8x32xf32, #tpu.memory_space<vmem>>, vector<1x8x32xf32>
      %39 = vector.broadcast %28 : vector<1x8x1xf32> to vector<1x8x32xf32>
      %40 = arith.mulf %39, %38 : vector<1x8x32xf32>
      %41 = arith.truncf %31 : vector<1x8x8xf32> to vector<1x8x8xbf16>
      %c0_27 = arith.constant 0 : index
      %c0_28 = arith.constant 0 : index
      %c0_29 = arith.constant 0 : index
      %42 = vector.load %arg6[%c0_27, %c0_28, %c0_29] : memref<1x8x32xbf16, #tpu.memory_space<vmem>>, vector<1x8x32xbf16>
      "tpu.trace_start"() <{level = 10 : i32, message = "bqk,bkv->bqv"}> : () -> ()
      %cst_30 = arith.constant dense<0.000000e+00> : vector<1x8x32xf32>
      %43 = tpu.matmul %41, %42, %cst_30 {dimension_numbers = #tpu.dot_dimension_numbers<[2], [1], [1], [2], [0, 0, 0, 1, 1, 2], [0], [0]>} : vector<1x8x8xbf16>, vector<1x8x32xbf16>, vector<1x8x32xf32> -> vector<1x8x32xf32>
      "tpu.trace_stop"() : () -> ()
      %44 = arith.addf %40, %43 : vector<1x8x32xf32>
      %c0_31 = arith.constant 0 : index
      %c0_32 = arith.constant 0 : index
      %c0_33 = arith.constant 0 : index
      %45 = vector.load %arg11[%c0_31, %c0_32, %c0_33] : memref<1x8x32xf32, #tpu.memory_space<vmem>>, vector<1x8x32xf32>
      tpu.vector_store %arg11[%c0_31, %c0_32, %c0_33], %44 {strides = array<i32>} : memref<1x8x32xf32, #tpu.memory_space<vmem>>, vector<1x8x32xf32>,
      %c0_34 = arith.constant 0 : index
      %c0_35 = arith.constant 0 : index
      %c0_36 = arith.constant 0 : index
      %46 = vector.load %arg9[%c0_34, %c0_35, %c0_36] : memref<1x8x1xf32, #tpu.memory_space<vmem>>, vector<1x8x1xf32>
      tpu.vector_store %arg9[%c0_34, %c0_35, %c0_36], %26 {strides = array<i32>} : memref<1x8x1xf32, #tpu.memory_space<vmem>>, vector<1x8x1xf32>,
    } else {
    }
    %c0_i32_2 = arith.constant 0 : i32
    %8 = arith.cmpi eq, %arg2, %c0_i32_2 : i32
    %9 = arith.extui %8 : i1 to i32
    %c0_i32_3 = arith.constant 0 : i32
    %10 = arith.cmpi ne, %9, %c0_i32_3 : i32
    scf.if %10 {
      %c0 = arith.constant 0 : index
      %c0_4 = arith.constant 0 : index
      %c0_5 = arith.constant 0 : index
      %11 = vector.load %arg10[%c0, %c0_4, %c0_5] : memref<1x8x1xf32, #tpu.memory_space<vmem>>, vector<1x8x1xf32>
      %12 = tpu.reciprocal %11 : vector<1x8x1xf32> -> vector<1x8x1xf32>
      %c0_6 = arith.constant 0 : index
      %c0_7 = arith.constant 0 : index
      %c0_8 = arith.constant 0 : index
      %13 = vector.load %arg11[%c0_6, %c0_7, %c0_8] : memref<1x8x32xf32, #tpu.memory_space<vmem>>, vector<1x8x32xf32>
      %14 = vector.broadcast %12 : vector<1x8x1xf32> to vector<1x8x32xf32>
      %15 = arith.mulf %13, %14 : vector<1x8x32xf32>
      %c0_9 = arith.constant 0 : index
      %c0_10 = arith.constant 0 : index
      %c0_11 = arith.constant 0 : index
      %16 = vector.load %arg8[%c0_9, %c0_10, %c0_11] : memref<1x8x32xf32, #tpu.memory_space<vmem>>, vector<1x8x32xf32>
      tpu.vector_store %arg8[%c0_9, %c0_10, %c0_11], %15 {strides = array<i32>} : memref<1x8x32xf32, #tpu.memory_space<vmem>>, vector<1x8x32xf32>,
    } else {
    }
    return
  }
  func.func @transform_0(%arg0: i32, %arg1: i32, %arg2: i32, %arg3: memref<2xi32, #tpu.memory_space<smem>>) -> (i32, i32, i32) {
    %c0_i32 = arith.constant 0 : i32
    %c0_i32_0 = arith.constant 0 : i32
    return %arg0, %arg1, %c0_i32 : i32, i32, i32
  }
  func.func @transform_1(%arg0: i32, %arg1: i32, %arg2: i32, %arg3: memref<2xi32, #tpu.memory_space<smem>>) -> (i32, i32, i32) {
    %0 = arith.index_cast %arg0 : i32 to index
    %1 = memref.load %arg3[%0] : memref<2xi32, #tpu.memory_space<smem>>
    %c1_i32 = arith.constant 1 : i32
    %2 = arith.subi %1, %c1_i32 : i32
    %3 = arith.minsi %arg2, %2 : i32
    %c0_i32 = arith.constant 0 : i32
    %c0_i32_0 = arith.constant 0 : i32
    return %arg0, %3, %c0_i32 : i32, i32, i32
  }
  func.func @transform_2(%arg0: i32, %arg1: i32, %arg2: i32, %arg3: memref<2xi32, #tpu.memory_space<smem>>) -> (i32, i32, i32) {
    %0 = arith.index_cast %arg0 : i32 to index
    %1 = memref.load %arg3[%0] : memref<2xi32, #tpu.memory_space<smem>>
    %c1_i32 = arith.constant 1 : i32
    %2 = arith.subi %1, %c1_i32 : i32
    %3 = arith.minsi %arg2, %2 : i32
    %c0_i32 = arith.constant 0 : i32
    %c0_i32_0 = arith.constant 0 : i32
    return %arg0, %3, %c0_i32 : i32, i32, i32
  }
  func.func @transform_3(%arg0: i32, %arg1: i32, %arg2: i32, %arg3: memref<2xi32, #tpu.memory_space<smem>>) -> (i32, i32, i32) {
    %c0_i32 = arith.constant 0 : i32
    %c0_i32_0 = arith.constant 0 : i32
    return %arg0, %arg1, %c0_i32 : i32, i32, i32
  }
  func.func @transform_4(%arg0: i32, %arg1: i32, %arg2: i32, %arg3: memref<2xi32, #tpu.memory_space<smem>>) -> (i32, i32, i32) {
    %c0_i32 = arith.constant 0 : i32
    %c0_i32_0 = arith.constant 0 : i32
    return %arg0, %arg1, %c0_i32 : i32, i32, i32
  }
}

</mosaic_0001>

<llo_original>
// kernel: tpu_custom_call.1
$region0: #{tpu_custom_call.1}
  #allocation0 [shape = 'u32[]', space=smem, size = 0x4, offset = 0x4, fixed_abs, tag = 'smem constant byte address 0x4 - core index']
  #allocation1 [shape = 'u32[144,128]{1,0:T(1,128)}', space=vmem, size = 0x12000, scoped, tag = 'internal scratch']
  #allocation2 [shape = 'f32[1,8,1]{2,1,0:T(8,128)}', space=vmem, size = 0x1000, scoped, tag = 'scratch operand']
  #allocation3 [shape = 'f32[1,8,1]{2,1,0:T(8,128)}', space=vmem, size = 0x1000, scoped, tag = 'scratch operand']
  #allocation4 [shape = 'f32[1,8,32]{2,1,0:T(8,128)}', space=vmem, size = 0x1000, scoped, tag = 'scratch operand']
  #allocation5 [shape = 's32[1]{0}', space=sflag, size = 0x4, scoped, tag = 'scoped memory for tpu_custom_call.1']
  #allocation6 [shape = 'u8[512]{0}', space=smem, size = 0x200, scoped, tag = 'prefetched SMEM operand 0']
  %s0 = inlined_call_operand.vmem [shape: s32[2], index: 0, kind: input, shape index: {}]
  %s1 = inlined_call_operand.vmem [shape: bf16[2,8,32], index: 1, kind: input, shape index: {}]
  %s2 = inlined_call_operand.vmem [shape: bf16[2,8,32], index: 2, kind: input, shape index: {}]
  %s3 = inlined_call_operand.vmem [shape: bf16[2,8,32], index: 3, kind: input, shape index: {}]
  %s4 = inlined_call_operand.vmem [shape: s32[2,8,1], index: 4, kind: input, shape index: {}]
  %s5 = inlined_call_operand.hbm [shape: f32[2,8,32], index: 5, kind: output, shape index: {}]
  %s6 = sld [smem:[#allocation0]]
  $region61: #{tpu_custom_call.1} parent=0
    _
  %s8 = ssub.s32 1, %s6
  %s9 = scalar_select 0, %s8, %s6
  %s10 = sshll.u32 %s0, 4
  %s11 = int_to_ptr.vmem [resolvable:$true] %s10
  %13 = dma.vmem_to_smem %s11, 16, [#allocation6], [#allocation5]
  %14 = dma.done [#allocation5], 16
  %15 = sfence
  $region1: #{tpu_custom_call.1} parent=0
    #allocation7 [shape = 'u8[8192]{0}', space=vmem, size = 0x2000, scoped, tag = 'output window, operand 0']
    #allocation8 [shape = 's32[2]{0}', space=sflag, size = 0x8, scoped, tag = 'scoped memory for tpu_custom_call.1']
    %16 = vsyncpa [#allocation8], 0
    %s17 = scalar_lea.sflag [#allocation8], 1
    %18 = vsyncpa %s17, 0
    loop: start=0, step=1, limit=4
    $region2: #{tpu_custom_call.1} parent=1 // loop_pre_header
      _
    $region3: #{tpu_custom_call.1} parent=1 // loop_header
      %s20 = sphi 0, %s24
      %p21 = scmp.ge.s32.totalorder %s20, 4
      %s27 = sphi 0, %s46
      %s28 = sphi 0, %s42
      %s29 = sphi 0, %s38
      %s30 = sphi 0, %s27
      %s31 = sphi 0, %s28
      %s32 = sphi 0, %s29
      %s33 = sphi 0, %s30
      %s34 = sphi 0, %s31
      %s35 = sphi 0, %s32
      %s51 = sphi 0, %s53
      %s54 = sphi 0, %s51
      %s55 = sphi 0, %s54
      %s71 = sphi 0, %s55
      %s87 = sphi 0, %s89
      %s90 = sphi 0, %s87
      %s91 = sphi 0, %s90
      %s107 = sphi 0, %s91
      %s123 = sphi 0, %s125
      %s126 = sphi 0, %s123
      %s127 = sphi 0, %s126
      %s143 = sphi 0, %s127
      %s151 = sphi 0, %s153
      %s154 = sphi 0, %s151
      %s155 = sphi 0, %s154
      %s171 = sphi 0, %s155
      %s179 = sphi 0, %s181
      %s182 = sphi 0, %s179
      %s183 = sphi 0, %s182
      %s199 = sphi 0, %s183
    $region4: #{tpu_custom_call.1} parent=1 // loop_header_branch
      %23 = sbr.rel (%p21) target = $region8
    $region5: #{tpu_custom_call.1} parent=1 // loop_body
      %s25 = ssub.s32 %s20, 1
      %s26 = ssub.s32 %s20, 2
      %s36 = sadd.s32 1, %s29
      %p37 = scmp.ge.s32.totalorder %s36, 1
      %s38 = scalar_select %p37, 0, %s36
      %s39 = sadd.s32 1, %s28
      %s40 = scalar_select %p37, %s39, %s28
      %p41 = scmp.ge.s32.totalorder %s40, 1
      %s42 = scalar_select %p41, 0, %s40
      %s43 = sadd.s32 1, %s27
      %s44 = scalar_select %p41, %s43, %s27
      %p45 = scmp.ge.s32.totalorder %s44, 2
      %s46 = scalar_select %p45, 0, %s44
      %s47 = ssub.s32 %s27, %s46
      %s48 = ssub.s32 %s28, %s42
      %s49 = sor.u32 %s47, %s48
      %p50 = scmp.eq.s32.totalorder %s49, 0
      %s52 = sadd.s32 %s51, 1
      %s53 = scalar_select %p50, %s51, %s52
      %p56 = pneg %p50
      %p57 = scmp.eq.s32.totalorder %s20, 1
      %p58 = por %p56, %p57
      %p59 = scmp.ne.s32.totalorder %s51, %s54
      %p60 = scmp.eq.s32.totalorder %s20, 0
      %p61 = por %p59, %p60
      %p62 = scmp.ne.s32.totalorder %s51, %s54
      %p63 = scmp.eq.s32.totalorder %s25, 1
      %p64 = por %p62, %p63
      %p65 = scmp.ne.s32.totalorder %s54, %s55
      %p66 = scmp.eq.s32.totalorder %s25, 0
      %p67 = por %p65, %p66
      %p68 = scmp.ne.s32.totalorder %s54, %s55
      %p69 = scmp.eq.s32.totalorder %s26, 1
      %p70 = por %p68, %p69
      %p72 = scmp.ne.s32.totalorder %s55, %s71
      %p73 = scmp.eq.s32.totalorder %s26, 0
      %p74 = por %p72, %p73
      %s75 = sld [smem:[#allocation6 + %s27]]
      %s76 = ssub.s32 %s75, 1
      %p77 = scmp.lt.s32.totalorder %s29, %s76
      %s78 = scalar_select %p77, %s29, %s76
      %s79 = sld [smem:[#allocation6 + %s46]]
      %s80 = ssub.s32 %s79, 1
      %p81 = scmp.lt.s32.totalorder %s38, %s80
      %s82 = scalar_select %p81, %s38, %s80
      %s83 = ssub.s32 %s27, %s46
      %s84 = ssub.s32 %s78, %s82
      %s85 = sor.u32 %s83, %s84
      %p86 = scmp.eq.s32.totalorder %s85, 0
      %s88 = sadd.s32 %s87, 1
      %s89 = scalar_select %p86, %s87, %s88
      %p92 = pneg %p86
      %p93 = scmp.eq.s32.totalorder %s20, 1
      %p94 = por %p92, %p93
      %p95 = scmp.ne.s32.totalorder %s87, %s90
      %p96 = scmp.eq.s32.totalorder %s20, 0
      %p97 = por %p95, %p96
      %p98 = scmp.ne.s32.totalorder %s87, %s90
      %p99 = scmp.eq.s32.totalorder %s25, 1
      %p100 = por %p98, %p99
      %p101 = scmp.ne.s32.totalorder %s90, %s91
      %p102 = scmp.eq.s32.totalorder %s25, 0
      %p103 = por %p101, %p102
      %p104 = scmp.ne.s32.totalorder %s90, %s91
      %p105 = scmp.eq.s32.totalorder %s26, 1
      %p106 = por %p104, %p105
      %p108 = scmp.ne.s32.totalorder %s91, %s107
      %p109 = scmp.eq.s32.totalorder %s26, 0
      %p110 = por %p108, %p109
      %s111 = sld [smem:[#allocation6 + %s27]]
      %s112 = ssub.s32 %s111, 1
      %p113 = scmp.lt.s32.totalorder %s29, %s112
      %s114 = scalar_select %p113, %s29, %s112
      %s115 = sld [smem:[#allocation6 + %s46]]
      %s116 = ssub.s32 %s115, 1
      %p117 = scmp.lt.s32.totalorder %s38, %s116
      %s118 = scalar_select %p117, %s38, %s116
      %s119 = ssub.s32 %s27, %s46
      %s120 = ssub.s32 %s114, %s118
      %s121 = sor.u32 %s119, %s120
      %p122 = scmp.eq.s32.totalorder %s121, 0
      %s124 = sadd.s32 %s123, 1
      %s125 = scalar_select %p122, %s123, %s124
      %p128 = pneg %p122
      %p129 = scmp.eq.s32.totalorder %s20, 1
      %p130 = por %p128, %p129
      %p131 = scmp.ne.s32.totalorder %s123, %s126
      %p132 = scmp.eq.s32.totalorder %s20, 0
      %p133 = por %p131, %p132
      %p134 = scmp.ne.s32.totalorder %s123, %s126
      %p135 = scmp.eq.s32.totalorder %s25, 1
      %p136 = por %p134, %p135
      %p137 = scmp.ne.s32.totalorder %s126, %s127
      %p138 = scmp.eq.s32.totalorder %s25, 0
      %p139 = por %p137, %p138
      %p140 = scmp.ne.s32.totalorder %s126, %s127
      %p141 = scmp.eq.s32.totalorder %s26, 1
      %p142 = por %p140, %p141
      %p144 = scmp.ne.s32.totalorder %s127, %s143
      %p145 = scmp.eq.s32.totalorder %s26, 0
      %p146 = por %p144, %p145
      %s147 = ssub.s32 %s27, %s46
      %s148 = ssub.s32 %s28, %s42
      %s149 = sor.u32 %s147, %s148
      %p150 = scmp.eq.s32.totalorder %s149, 0
      %s152 = sadd.s32 %s151, 1
      %s153 = scalar_select %p150, %s151, %s152
      %p156 = pneg %p150
      %p157 = scmp.eq.s32.totalorder %s20, 1
      %p158 = por %p156, %p157
      %p159 = scmp.ne.s32.totalorder %s151, %s154
      %p160 = scmp.eq.s32.totalorder %s20, 0
      %p161 = por %p159, %p160
      %p162 = scmp.ne.s32.totalorder %s151, %s154
      %p163 = scmp.eq.s32.totalorder %s25, 1
      %p164 = por %p162, %p163
      %p165 = scmp.ne.s32.totalorder %s154, %s155
      %p166 = scmp.eq.s32.totalorder %s25, 0
      %p167 = por %p165, %p166
      %p168 = scmp.ne.s32.totalorder %s154, %s155
      %p169 = scmp.eq.s32.totalorder %s26, 1
      %p170 = por %p168, %p169
      %p172 = scmp.ne.s32.totalorder %s155, %s171
      %p173 = scmp.eq.s32.totalorder %s26, 0
      %p174 = por %p172, %p173
      %s175 = ssub.s32 %s27, %s46
      %s176 = ssub.s32 %s28, %s42
      %s177 = sor.u32 %s175, %s176
      %p178 = scmp.eq.s32.totalorder %s177, 0
      %s180 = sadd.s32 %s179, 1
      %s181 = scalar_select %p178, %s179, %s180
      %p184 = pneg %p178
      %p185 = scmp.eq.s32.totalorder %s20, 1
      %p186 = por %p184, %p185
      %p187 = scmp.ne.s32.totalorder %s179, %s182
      %p188 = scmp.eq.s32.totalorder %s20, 0
      %p189 = por %p187, %p188
      %p190 = scmp.ne.s32.totalorder %s179, %s182
      %p191 = scmp.eq.s32.totalorder %s25, 1
      %p192 = por %p190, %p191
      %p193 = scmp.ne.s32.totalorder %s182, %s183
      %p194 = scmp.eq.s32.totalorder %s25, 0
      %p195 = por %p193, %p194
      %p196 = scmp.ne.s32.totalorder %s182, %s183
      %p197 = scmp.eq.s32.totalorder %s26, 1
      %p198 = por %p196, %p197
      %p200 = scmp.ne.s32.totalorder %s183, %s199
      %p201 = scmp.eq.s32.totalorder %s26, 0
      %p202 = por %p200, %p201
      %p203 = scmp.le.s32.totalorder 1, %s20
      %p204 = scmp.lt.s32.totalorder %s20, 3
      %p205 = pnand %p203, %p204
      %p206 = pneg %p205
      // Predicated region
      $region9: #{tpu_custom_call.1} parent=5 // pred_check
        _
      $region10: #{tpu_custom_call.1} parent=5 // pred_check_branch
        %208 = sbr.rel (%p205) target = $region12
      $region11: #{tpu_custom_call.1} parent=5 // pred_region
        %s209 = ssub.s32 %s20, 1
      $region12: #{tpu_custom_call.1} parent=5 // pred_fallthru
        _
      %p210 = scmp.lt.s32.totalorder %s20, 2
      // Predicated region
      $region13: #{tpu_custom_call.1} parent=5 // pred_check
        %p211 = pneg %p210
      $region14: #{tpu_custom_call.1} parent=5 // pred_check_branch
        %213 = sbr.rel (%p211) target = $region16
      $region15: #{tpu_custom_call.1} parent=5 // pred_region
        // Predicated region
        $region17: #{tpu_custom_call.1} parent=15 // pred_check
          %p214 = pneg %p61
        $region18: #{tpu_custom_call.1} parent=15 // pred_check_branch
          %216 = sbr.rel (%p214) target = $region20
        $region19: #{tpu_custom_call.1} parent=15 // pred_region
          %p217 = scmp.lt.s32.totalorder %s27, 1
          %s218 = scalar_select %p217, %s27, 1
          %p219 = scmp.lt.s32.totalorder %s28, 0
          %s220 = scalar_select %p219, %s28, 0
          %s221 = sadd.s32 %s220, %s218
          %s222 = smul.addr %s221, 4
          %s223 = scalar_lea.vmem %s1, %s222
        $region20: #{tpu_custom_call.1} parent=15 // pred_fallthru
          _
        // Predicated region
        $region21: #{tpu_custom_call.1} parent=15 // pred_check
          %p224 = pneg %p97
        $region22: #{tpu_custom_call.1} parent=15 // pred_check_branch
          %226 = sbr.rel (%p224) target = $region24
        $region23: #{tpu_custom_call.1} parent=15 // pred_region
          %s227 = sld [smem:[#allocation6 + %s27]]
          %s228 = ssub.s32 %s227, 1
          %p229 = scmp.lt.s32.totalorder %s29, %s228
          %s230 = scalar_select %p229, %s29, %s228
          %p231 = scmp.lt.s32.totalorder %s27, 1
          %s232 = scalar_select %p231, %s27, 1
          %p233 = scmp.lt.s32.totalorder %s230, 0
          %s234 = scalar_select %p233, %s230, 0
          %s235 = sadd.s32 %s234, %s232
          %s236 = smul.addr %s235, 4
          %s237 = scalar_lea.vmem %s2, %s236
          %s238 = sld [smem:[#allocation6 + %s27]]
          %s239 = ssub.s32 %s238, 1
          %p240 = scmp.lt.s32.totalorder %s29, %s239
          %s241 = scalar_select %p240, %s29, %s239
        $region24: #{tpu_custom_call.1} parent=15 // pred_fallthru
          _
        // Predicated region
        $region25: #{tpu_custom_call.1} parent=15 // pred_check
          %p242 = pneg %p133
        $region26: #{tpu_custom_call.1} parent=15 // pred_check_branch
          %244 = sbr.rel (%p242) target = $region28
        $region27: #{tpu_custom_call.1} parent=15 // pred_region
          %s245 = sld [smem:[#allocation6 + %s27]]
          %s246 = ssub.s32 %s245, 1
          %p247 = scmp.lt.s32.totalorder %s29, %s246
          %s248 = scalar_select %p247, %s29, %s246
          %p249 = scmp.lt.s32.totalorder %s27, 1
          %s250 = scalar_select %p249, %s27, 1
          %p251 = scmp.lt.s32.totalorder %s248, 0
          %s252 = scalar_select %p251, %s248, 0
          %s253 = sadd.s32 %s252, %s250
          %s254 = smul.addr %s253, 4
          %s255 = scalar_lea.vmem %s3, %s254
          %s256 = sld [smem:[#allocation6 + %s27]]
          %s257 = ssub.s32 %s256, 1
          %p258 = scmp.lt.s32.totalorder %s29, %s257
          %s259 = scalar_select %p258, %s29, %s257
        $region28: #{tpu_custom_call.1} parent=15 // pred_fallthru
          _
        // Predicated region
        $region29: #{tpu_custom_call.1} parent=15 // pred_check
          %p260 = pneg %p161
        $region30: #{tpu_custom_call.1} parent=15 // pred_check_branch
          %262 = sbr.rel (%p260) target = $region32
        $region31: #{tpu_custom_call.1} parent=15 // pred_region
          %p263 = scmp.lt.s32.totalorder %s27, 1
          %s264 = scalar_select %p263, %s27, 1
          %p265 = scmp.lt.s32.totalorder %s28, 0
          %s266 = scalar_select %p265, %s28, 0
          %s267 = sadd.s32 %s266, %s264
          %s268 = smul.addr %s267, 8
          %s269 = scalar_lea.vmem %s4, %s268
        $region32: #{tpu_custom_call.1} parent=15 // pred_fallthru
          _
      $region16: #{tpu_custom_call.1} parent=5 // pred_fallthru
        _
      %p270 = scmp.le.s32.totalorder 1, %s20
      %p271 = scmp.lt.s32.totalorder %s20, 3
      %p272 = pnand %p270, %p271
      %p273 = pneg %p272
      // Predicated region
      $region33: #{tpu_custom_call.1} parent=5 // pred_check
        _
      $region34: #{tpu_custom_call.1} parent=5 // pred_check_branch
        %275 = sbr.rel (%p272) target = $region36
      $region35: #{tpu_custom_call.1} parent=5 // pred_region
        %s276 = ssub.s32 %s20, 1
        %p277 = scmp.lt.s32.totalorder %s30, 1
        %s278 = scalar_select %p277, %s30, 1
        %p279 = scmp.lt.s32.totalorder %s31, 0
        %s280 = scalar_select %p279, %s31, 0
        %s281 = sadd.s32 %s280, %s278
        %s282 = smul.addr %s281, 4
        %s283 = scalar_lea.vmem %s1, %s282
        %p284 = pneg %p67
        %p285 = pneg %p64
        %s286 = sld [smem:[#allocation6 + %s30]]
        %s287 = ssub.s32 %s286, 1
        %p288 = scmp.lt.s32.totalorder %s32, %s287
        %s289 = scalar_select %p288, %s32, %s287
        %p290 = scmp.lt.s32.totalorder %s30, 1
        %s291 = scalar_select %p290, %s30, 1
        %p292 = scmp.lt.s32.totalorder %s289, 0
        %s293 = scalar_select %p292, %s289, 0
        %s294 = sadd.s32 %s293, %s291
        %s295 = smul.addr %s294, 4
        %s296 = scalar_lea.vmem %s2, %s295
        %p297 = pneg %p103
        %p298 = pneg %p100
        %s299 = sld [smem:[#allocation6 + %s30]]
        %s300 = ssub.s32 %s299, 1
        %p301 = scmp.lt.s32.totalorder %s32, %s300
        %s302 = scalar_select %p301, %s32, %s300
        %p303 = scmp.lt.s32.totalorder %s30, 1
        %s304 = scalar_select %p303, %s30, 1
        %p305 = scmp.lt.s32.totalorder %s302, 0
        %s306 = scalar_select %p305, %s302, 0
        %s307 = sadd.s32 %s306, %s304
        %s308 = smul.addr %s307, 4
        %s309 = scalar_lea.vmem %s3, %s308
        %p310 = pneg %p139
        %p311 = pneg %p136
        %p312 = scmp.lt.s32.totalorder %s30, 1
        %s313 = scalar_select %p312, %s30, 1
        %p314 = scmp.lt.s32.totalorder %s31, 0
        %s315 = scalar_select %p314, %s31, 0
        %s316 = sadd.s32 %s315, %s313
        %s317 = smul.addr %s316, 8
        %s318 = scalar_lea.vmem %s4, %s317
        %p319 = pneg %p167
        %p320 = pneg %p164
        %p321 = pneg %p195
        %p322 = pneg %p192
        %s323 = sand.u32 %s182, 1
        %s324 = scalar_lea.sflag [#allocation8], %s323
        %s325 = sand.u32 %s182, 1
        %s326 = smul.addr %s325, 8
        %s327 = scalar_lea.vmem [#allocation7], %s326
        %p328 = scmp.lt.s32.totalorder %s30, 1
        %s329 = scalar_select %p328, %s30, 1
        %p330 = scmp.lt.s32.totalorder %s31, 0
        %s331 = scalar_select %p330, %s31, 0
        %s332 = sadd.s32 %s331, %s329
        %s333 = smul.addr %s332, 4
        %s334 = scalar_lea.vmem %s1, %s333
        %s335 = sld [smem:[#allocation6 + %s30]]
        %s336 = ssub.s32 %s335, 1
        %p337 = scmp.lt.s32.totalorder %s32, %s336
        %s338 = scalar_select %p337, %s32, %s336
        %p339 = scmp.lt.s32.totalorder %s30, 1
        %s340 = scalar_select %p339, %s30, 1
        %p341 = scmp.lt.s32.totalorder %s338, 0
        %s342 = scalar_select %p341, %s338, 0
        %s343 = sadd.s32 %s342, %s340
        %s344 = smul.addr %s343, 4
        %s345 = scalar_lea.vmem %s2, %s344
        %s346 = sld [smem:[#allocation6 + %s30]]
        %s347 = ssub.s32 %s346, 1
        %p348 = scmp.lt.s32.totalorder %s32, %s347
        %s349 = scalar_select %p348, %s32, %s347
        %s350 = sld [smem:[#allocation6 + %s30]]
        %s351 = ssub.s32 %s350, 1
        %p352 = scmp.lt.s32.totalorder %s32, %s351
        %s353 = scalar_select %p352, %s32, %s351
        %p354 = scmp.lt.s32.totalorder %s30, 1
        %s355 = scalar_select %p354, %s30, 1
        %p356 = scmp.lt.s32.totalorder %s353, 0
        %s357 = scalar_select %p356, %s353, 0
        %s358 = sadd.s32 %s357, %s355
        %s359 = smul.addr %s358, 4
        %s360 = scalar_lea.vmem %s3, %s359
        %s361 = sld [smem:[#allocation6 + %s30]]
        %s362 = ssub.s32 %s361, 1
        %p363 = scmp.lt.s32.totalorder %s32, %s362
        %s364 = scalar_select %p363, %s32, %s362
        %p365 = scmp.lt.s32.totalorder %s30, 1
        %s366 = scalar_select %p365, %s30, 1
        %p367 = scmp.lt.s32.totalorder %s31, 0
        %s368 = scalar_select %p367, %s31, 0
        %s369 = sadd.s32 %s368, %s366
        %s370 = smul.addr %s369, 8
        %s371 = scalar_lea.vmem %s4, %s370
        %p373 = scmp.eq.s32.totalorder %s32, 0
        // Predicated region
        $region37: #{tpu_custom_call.1} parent=35 // pred_check
          %p374 = pneg %p373
        $region38: #{tpu_custom_call.1} parent=35 // pred_check_branch
          %376 = sbr.rel (%p374) target = $region40
        $region39: #{tpu_custom_call.1} parent=35 // pred_region
          %vm377 = vcmask 7168
          %378 = vst.msk [vmem:[#allocation2] sm:$0xff] %vm377, -inf
          %379 = vst.msk [vmem:[#allocation3] sm:$0xff] %vm377, 0.0
          %vm380 = vcmask 261120
          %381 = vst.msk [vmem:[#allocation4] sm:$0xff] %vm380, 0.0
        $region40: #{tpu_custom_call.1} parent=35 // pred_fallthru
          _
        %s382 = sld [smem:[#allocation6 + %s30]]
        %p383 = scmp.lt.s32.totalorder %s32, %s382
        // Predicated region
        $region41: #{tpu_custom_call.1} parent=35 // pred_check
          %p384 = pneg %p383
        $region42: #{tpu_custom_call.1} parent=35 // pred_check_branch
          %386 = sbr.rel (%p384) target = $region44
        $region43: #{tpu_custom_call.1} parent=35 // pred_region
          %v387 = vld [vmem:[%s334] sm:$0xf]
          %v388 = vld [vmem:[%s345] sm:$0xf]
          %vm389 = vcmask 261120
          %v391 = vsel %vm389, %v387, 0
          %v394 = vsel %vm389, %v388, 0
          %396 = vmatprep.subr.bf16.mxu0 0
          %397 = vmatpush1.bf16.xpose.msra.mxu0 %v394
          %398 = vmatprep.subr.bf16.mxu0 0
          %399 = vmatpush1.bf16.xpose.msra.mxu0 0
          %400 = vmatprep.subr.bf16.mxu0 0
          %401 = vmatpush1.bf16.xpose.msra.mxu0 0
          %402 = vmatprep.subr.bf16.mxu0 0
          %403 = vmatpush1.bf16.xpose.msra.mxu0 0
          %404 = vmatprep.subr.bf16.mxu0 0
          %405 = vmatpush1.bf16.xpose.msra.mxu0 0
          %406 = vmatprep.subr.bf16.mxu0 0
          %407 = vmatpush1.bf16.xpose.msra.mxu0 0
          %408 = vmatprep.subr.bf16.mxu0 0
          %409 = vmatpush1.bf16.xpose.msra.mxu0 0
          %410 = vmatprep.subr.bf16.mxu0 0
          %411 = vmatpush1.bf16.xpose.msra.mxu0 0
          %412 = vmatprep.subr.bf16.mxu0 0
          %413 = vmatpush1.bf16.xpose.msra.mxu0 0
          %414 = vmatprep.subr.bf16.mxu0 0
          %415 = vmatpush1.bf16.xpose.msra.mxu0 0
          %416 = vmatprep.subr.bf16.mxu0 0
          %417 = vmatpush1.bf16.xpose.msra.mxu0 0
          %418 = vmatprep.subr.bf16.mxu0 0
          %419 = vmatpush1.bf16.xpose.msra.mxu0 0
          %420 = vmatprep.subr.bf16.mxu0 0
          %421 = vmatpush1.bf16.xpose.msra.mxu0 0
          %422 = vmatprep.subr.bf16.mxu0 0
          %423 = vmatpush1.bf16.xpose.msra.mxu0 0
          %424 = vmatprep.subr.bf16.mxu0 0
          %425 = vmatpush1.bf16.xpose.msra.mxu0 0
          %426 = vmatprep.subr.bf16.mxu0 0
          %427 = vmatpush1.bf16.xpose.msra.mxu0 0
          %428 = vmatprep.mubr.bf16.mxu0 0
          %429 = vmatmul.mubr.bf16.gmra.mrb[0].mxu0 %v391
          %v430 = vpop.f32.mrb[0].mxu0
          %v431 = vadd.f32 0.0, %v430
          %v432 = vpop.f32.mrb[0].mxu0
          %v433 = vpop.f32.mrb[0].mxu0
          %v434 = vpop.f32.mrb[0].mxu0
          %435 = vdwg.mxu0
          %s436 = smul.u32 %s32, 8
          %v437 = vlaneseq
          %v438 = vand.u32 %v437, 127
          %v439 = vld [vmem:[%s371] sm:$0xff]
          %v440 = vstv %s436
          %v441 = vsub.s32 %v439, %v440
          %442 = vset.pattern.permute.xlu0 0
          %443 = vperm.xlu0 %442, %v441
          %v444 = vpop.permute.xlu0 %443
          %vm445 = vcmp.lt.s32.totalorder %v438, %v444
          %v446 = vsel %vm445, %v431, -1000000.0
          %v447 = vld [vmem:[#allocation2] sm:$0xff]
          %vm448 = vcmask 64512
          %v449 = vsel %vm448, %v446, -inf
          %450 = vmax.xlane.f32.xlu0 %v449
          %v451 = vpop.xlane.xlu0 %450
          %v452 = vmax.f32 %v447, %v451
          %v453 = vsub.f32 %v447, %v452
          %v454 = vmul.f32 %v453, 1.442695
          %v455 = vpow.pop %v454
          %457 = vset.pattern.permute.xlu0 0
          %458 = vperm.xlu0 %457, %v452
          %v459 = vpop.permute.xlu0 %458
          %v461 = vsub.f32 %v446, %v459
          %v462 = vmul.f32 %v461, 1.442695
          %v463 = vpow.pop %v462
          %v464 = vld [vmem:[#allocation3] sm:$0xff]
          %v465 = vmul.f32 %v455, %v464
          %v466 = vsel %vm448, %v463, 0.0
          %467 = vadd.xlane.f32.xlu0 %v466
          %v468 = vpop.xlane.xlu0 %467
          %v469 = vadd.f32 %v465, %v468
          %vm470 = vcmask 7168
          %471 = vst.msk [vmem:[#allocation3] sm:$0xff] %vm470, %v469
          %v472 = vld [vmem:[#allocation4] sm:$0xff]
          %474 = vset.pattern.permute.xlu0 0
          %475 = vperm.xlu0 %474, %v455
          %v476 = vpop.permute.xlu0 %475
          %v478 = vmul.f32 %v476, %v472
          %v479 = vpack.c.bf16 %v463, %v463
          %v480 = vld [vmem:[%s360] sm:$0xf]
          %v482 = vsel %vm448, %v479, 0
          %vm484 = vcmask 1043456
          %v486 = vsel %vm484, %v480, 0
          %488 = vmatprep.subr.bf16.mxu0 0
          %489 = vmatpush1.bf16.msra.mxu0 %v486
          %490 = vmatprep.subr.bf16.mxu0 0
          %491 = vmatpush1.bf16.msra.mxu0 0
          %492 = vmatprep.subr.bf16.mxu0 0
          %493 = vmatpush1.bf16.msra.mxu0 0
          %494 = vmatprep.subr.bf16.mxu0 0
          %495 = vmatpush1.bf16.msra.mxu0 0
          %496 = vmatprep.subr.bf16.mxu0 0
          %497 = vmatpush1.bf16.msra.mxu0 0
          %498 = vmatprep.subr.bf16.mxu0 0
          %499 = vmatpush1.bf16.msra.mxu0 0
          %500 = vmatprep.subr.bf16.mxu0 0
          %501 = vmatpush1.bf16.msra.mxu0 0
          %502 = vmatprep.subr.bf16.mxu0 0
          %503 = vmatpush1.bf16.msra.mxu0 0
          %504 = vmatprep.subr.bf16.mxu0 0
          %505 = vmatpush1.bf16.msra.mxu0 0
          %506 = vmatprep.subr.bf16.mxu0 0
          %507 = vmatpush1.bf16.msra.mxu0 0
          %508 = vmatprep.subr.bf16.mxu0 0
          %509 = vmatpush1.bf16.msra.mxu0 0
          %510 = vmatprep.subr.bf16.mxu0 0
          %511 = vmatpush1.bf16.msra.mxu0 0
          %512 = vmatprep.subr.bf16.mxu0 0
          %513 = vmatpush1.bf16.msra.mxu0 0
          %514 = vmatprep.subr.bf16.mxu0 0
          %515 = vmatpush1.bf16.msra.mxu0 0
          %516 = vmatprep.subr.bf16.mxu0 0
          %517 = vmatpush1.bf16.msra.mxu0 0
          %518 = vmatprep.subr.bf16.mxu0 0
          %519 = vmatpush1.bf16.msra.mxu0 0
          %520 = vmatprep.mubr.bf16.mxu0 0
          %521 = vmatmul.mubr.bf16.gmra.mrb[0].mxu0 %v482
          %v522 = vpop.f32.mrb[0].mxu0
          %v523 = vadd.f32 0.0, %v522
          %v524 = vpop.f32.mrb[0].mxu0
          %v525 = vpop.f32.mrb[0].mxu0
          %v526 = vpop.f32.mrb[0].mxu0
          %527 = vdwg.mxu0
          %v528 = vadd.f32 %v478, %v523
          %529 = vst.msk [vmem:[#allocation4] sm:$0xff] %vm389, %v528
          %530 = vst.msk [vmem:[#allocation2] sm:$0xff] %vm470, %v452
        $region44: #{tpu_custom_call.1} parent=35 // pred_fallthru
          _
        // Predicated region
        $region45: #{tpu_custom_call.1} parent=35 // pred_check
          %p531 = pneg %p373
        $region46: #{tpu_custom_call.1} parent=35 // pred_check_branch
          %533 = sbr.rel (%p531) target = $region48
        $region47: #{tpu_custom_call.1} parent=35 // pred_region
          %v534 = vld [vmem:[#allocation3] sm:$0xff]
          %v535 = vrcp.pop %v534
          %v536 = vld [vmem:[#allocation4] sm:$0xff]
          %538 = vset.pattern.permute.xlu0 0
          %539 = vperm.xlu0 %538, %v535
          %v540 = vpop.permute.xlu0 %539
          %v542 = vmul.f32 %v536, %v540
          %vm543 = vcmask 261120
          %544 = vst.msk [vmem:[%s327] sm:$0xff] %vm543, %v542
        $region48: #{tpu_custom_call.1} parent=35 // pred_fallthru
          _
        %s545 = sand.u32 %s182, 1
        %s546 = scalar_lea.sflag [#allocation8], %s545
        %s547 = sand.u32 %s182, 1
        %s548 = smul.addr %s547, 8
        %s549 = scalar_lea.vmem [#allocation7], %s548
        // Predicated region
        $region49: #{tpu_custom_call.1} parent=35 // pred_check
          %p550 = pneg %p192
        $region50: #{tpu_custom_call.1} parent=35 // pred_check_branch
          %552 = sbr.rel (%p550) target = $region52
        $region51: #{tpu_custom_call.1} parent=35 // pred_region
          %s554 = ssub.s32 128, 128
          %555 = vsyncadd %s546, %s554
          %s556 = sadd.s32 %s31, %s30
          %s557 = smul.addr %s556, 128
          %s558 = scalar_lea.hbm %s5, %s557
          %s560 = sshll.u32 %s549, 4
          %s561 = int_to_ptr.vmem [resolvable:$true] %s560
          %563 = dma.vmem_to_hbm [thread:$0]  %s561, 128, %s558, %s546
        $region52: #{tpu_custom_call.1} parent=35 // pred_fallthru
          _
      $region36: #{tpu_custom_call.1} parent=5 // pred_fallthru
        _
      %p564 = scmp.le.s32.totalorder 2, %s20
      // Predicated region
      $region53: #{tpu_custom_call.1} parent=5 // pred_check
        %p565 = pneg %p564
      $region54: #{tpu_custom_call.1} parent=5 // pred_check_branch
        %567 = sbr.rel (%p565) target = $region56
      $region55: #{tpu_custom_call.1} parent=5 // pred_region
        %s568 = ssub.s32 %s20, 2
        // Predicated region
        $region57: #{tpu_custom_call.1} parent=55 // pred_check
          %p569 = pneg %p198
        $region58: #{tpu_custom_call.1} parent=55 // pred_check_branch
          %571 = sbr.rel (%p569) target = $region60
        $region59: #{tpu_custom_call.1} parent=55 // pred_region
          %s572 = sand.u32 %s183, 1
          %s573 = scalar_lea.sflag [#allocation8], %s572
          %s574 = sand.u32 %s183, 1
          %s575 = smul.addr %s574, 8
          %s576 = scalar_lea.vmem [#allocation7], %s575
          %577 = dma.done %s573, 128
        $region60: #{tpu_custom_call.1} parent=55 // pred_fallthru
          _
      $region56: #{tpu_custom_call.1} parent=5 // pred_fallthru
        _
    $region6: #{tpu_custom_call.1} parent=1 // loop_footer
      %s24 = sadd.s32 1, %s20
    $region7: #{tpu_custom_call.1} parent=1 // loop_footer_branch
      %19 = sbr.rel target = $region3
    $region8: #{tpu_custom_call.1} parent=1 // loop_exit
      _
    %578 = vsyncpa [#allocation8], 1
    %s579 = scalar_lea.sflag [#allocation8], 1
    %580 = vsyncpa %s579, 1

</llo_original>
